<compile_context>
chip_gen: v5e
topology: v5e:2x2
jax: 0.10.0
libtpu: 0.0.40
codegen_flags: <defaults>
</compile_context>

<pallas_src>
import jax
import jax.numpy as jnp
from jax.experimental import pallas as pl
from jax.experimental.pallas import tpu as pltpu

D = 16          # hidden width (NeuralNetwork(d=16))
N_OUT = 4       # len(Result)
LANE = 128      # TPU lane width
TILE_B = 8192   # default batch tile (lanes); multiple of 128


def _round_up(n, m):
    return ((n + m - 1) // m) * m


def _mlp_softmax_kernel(x_ref, w_ref, b_ref, o_ref):
    # x_ref: (D, TB) f32    w_ref: (4, D, D) bf16 (out, in)
    # b_ref: (4, D, 1) f32  o_ref: (N_OUT, TB) f32
    h = x_ref[...].astype(jnp.bfloat16)                       # (D, TB)

    # Three Linear+ReLU layers: (16,16) @ (16,TB), f32 accumulate.
    for layer in range(3):
        pre = jnp.dot(w_ref[layer], h,
                      preferred_element_type=jnp.float32)     # (D, TB)
        pre = pre + b_ref[layer]                               # (D,1) lane-bcast
        h = jnp.maximum(pre, 0.0).astype(jnp.bfloat16)

    # Final Linear: last-layer weights are zero-padded (4,16)->(16,16), so
    # only rows 0..3 of the result are meaningful.
    logits = (jnp.dot(w_ref[3], h, preferred_element_type=jnp.float32)
              + b_ref[3])                                      # (D, TB)

    # direction = softmax over rows 0..2; movement = row 3 (raw logit).
    d_logits = logits[:3, :]                                   # (3, TB)
    m = jnp.max(d_logits, axis=0, keepdims=True)               # (1, TB)
    e = jnp.exp(d_logits - m)                                  # (3, TB)
    s = jnp.sum(e, axis=0, keepdims=True)                      # (1, TB)
    direction = e * pl.reciprocal(s, approx=True)

    out = jnp.concatenate([direction, logits[3:4, :]], axis=0)  # (4, TB)
    o_ref[...] = out.astype(o_ref.dtype)


def neural_network_forward(x, params, *, tile_b=TILE_B):
    """x: (B, D) f32; params = (w_pack (4,D,D) bf16 (out,in), b_pack (4,D,1) f32).

    Returns (B, N_OUT) f32 matching the PyTorch forward.
    """
    w_pack, b_pack = params
    B, d_in = x.shape
    assert d_in == w_pack.shape[2]

    x_t = x.T                                                  # (D, B)

    b_pad = _round_up(B, LANE)
    tb = min(_round_up(tile_b, LANE), b_pad)
    # Give the grid >= 2 steps when the batch allows (v7x megacore sharding).
    if b_pad >= 2 * LANE:
        tb = min(tb, _round_up(pl.cdiv(b_pad, 2), LANE))
    tb = max(tb, LANE)

    b_padded = _round_up(B, tb)
    if b_padded != B:
        x_t = jnp.pad(x_t, ((0, 0), (0, b_padded - B)))
    grid = (b_padded // tb,)

    out_t = pl.pallas_call(
        _mlp_softmax_kernel,
        out_shape=jax.ShapeDtypeStruct((N_OUT, b_padded), jnp.float32),
        grid_spec=pltpu.PrefetchScalarGridSpec(
            num_scalar_prefetch=0,
            grid=grid,
            in_specs=[
                pl.BlockSpec((d_in, tb), lambda i: (0, i)),        # x: tiled
                pl.BlockSpec(w_pack.shape, lambda i: (0, 0, 0)),   # resident
                pl.BlockSpec(b_pack.shape, lambda i: (0, 0, 0)),   # resident
            ],
            out_specs=pl.BlockSpec((N_OUT, tb), lambda i: (0, i)),
        ),
        compiler_params=pltpu.CompilerParams(
            dimension_semantics=("parallel",)),
    )(x_t, w_pack, b_pack)

    out_t = out_t if b_padded == B else out_t[:, :B]
    return out_t.T                                             # (B, N_OUT)


def init_params(key, d=D, n_out=N_OUT):
    """PyTorch-style uniform(-1/sqrt(fan_in), 1/sqrt(fan_in)) init.

    Weights returned as (in, out) f32 lists (transposed vs nn.Linear.weight);
    pack with pack_params() for the kernel.
    """
    dims = [(d, d), (d, d), (d, d), (d, n_out)]
    ws, bs = [], []
    keys = jax.random.split(key, 2 * len(dims))
    for i, (fan_in, fan_out) in enumerate(dims):
        bound = 1.0 / (float(fan_in) ** 0.5)
        w = jax.random.uniform(keys[2 * i], (fan_in, fan_out),
                               minval=-bound, maxval=bound, dtype=jnp.float32)
        b = jax.random.uniform(keys[2 * i + 1], (fan_out,),
                               minval=-bound, maxval=bound, dtype=jnp.float32)
        ws.append(w)
        bs.append(b)
    return ws, bs


def pack_params(ws, bs, d=D):
    """Pack into kernel layout: weights (4,d,d) bf16 in (out,in) orientation
    (last layer zero-padded 4->d output rows), biases (4,d,1) f32."""
    w_list, b_list = [], []
    for w, b in zip(ws, bs):
        wt = w.T                                               # (out, in)
        fan_out = wt.shape[0]
        if fan_out < d:
            wt = jnp.pad(wt, ((0, d - fan_out), (0, 0)))
            b = jnp.pad(b, ((0, d - fan_out),))
        w_list.append(wt)
        b_list.append(b)
    w_pack = jnp.stack(w_list).astype(jnp.bfloat16)            # (4, d, d)
    b_pack = jnp.stack(b_list)[:, :, None].astype(jnp.float32)  # (4, d, 1)
    return w_pack, b_pack


def reference_forward_f32(x, ws, bs):
    """Pure-f32 JAX reference mirroring the PyTorch forward exactly."""
    h = x
    for w, b in zip(ws[:3], bs[:3]):
        h = jnp.maximum(h @ w + b, 0.0)
    logits = h @ ws[3] + bs[3]
    direction = jax.nn.softmax(logits[:, :3], axis=1)
    return jnp.concatenate([direction, logits[:, 3:4]], axis=1)


def reference_forward_bf16(x, ws, bs):
    """Reference mirroring the kernel's bf16-matmul / f32-accumulate numerics."""
    h = x.astype(jnp.bfloat16)
    for w, b in zip(ws[:3], bs[:3]):
        pre = jnp.dot(h, w.astype(jnp.bfloat16),
                      preferred_element_type=jnp.float32) + b
        h = jnp.maximum(pre, 0.0).astype(jnp.bfloat16)
    logits = jnp.dot(h, ws[3].astype(jnp.bfloat16),
                     preferred_element_type=jnp.float32) + bs[3]
    direction = jax.nn.softmax(logits[:, :3], axis=1)
    return jnp.concatenate([direction, logits[:, 3:4]], axis=1)


if __name__ == "__main__":
    key = jax.random.PRNGKey(0)
    k_x, k_p, k_x2 = jax.random.split(key, 3)

    ws, bs = init_params(k_p)
    params = pack_params(ws, bs)

    # Primary small test: B=8 (single grid step after lane padding to 128).
    B = 8
    x = jax.random.normal(k_x, (B, D), dtype=jnp.float32)
    out = jax.block_until_ready(neural_network_forward(x, params))
    assert out.shape == (B, N_OUT)
    assert jnp.allclose(out, reference_forward_bf16(x, ws, bs),
                        atol=2e-3, rtol=2e-3), "mismatch vs bf16 reference"
    assert jnp.allclose(out, reference_forward_f32(x, ws, bs),
                        atol=5e-2, rtol=5e-2), "mismatch vs f32 reference"

    # Secondary test exercising grid > 1 + batch-tail padding (B=200 ->
    # padded to 256, tb=128 -> 2 grid steps).
    B2 = 200
    x2 = jax.random.normal(k_x2, (B2, D), dtype=jnp.float32)
    out2 = jax.block_until_ready(neural_network_forward(x2, params))
    assert out2.shape == (B2, N_OUT)
    assert jnp.allclose(out2, reference_forward_bf16(x2, ws, bs),
                        atol=2e-3, rtol=2e-3), "mismatch vs bf16 reference (grid)"

    print("KERNEL_OK")
</pallas_src>

<mosaic_0001>
module attributes {stable_mosaic.version = 11 : i64} {
  func.func @_mlp_softmax_kernel(%arg0: i32, %arg1: memref<16x128xf32, #tpu.memory_space<vmem>>, %arg2: memref<4x16x16xbf16, #tpu.memory_space<vmem>>, %arg3: memref<4x16x1xf32, #tpu.memory_space<vmem>>, %arg4: memref<4x128xf32, #tpu.memory_space<vmem>>) attributes {dimension_semantics = [#tpu.dimension_semantics<parallel>], iteration_bounds = array<i64: 1>, scalar_prefetch = 0 : i64, scratch_operands = 0 : i64, tpu.core_type = #tpu.core_type<tc>, window_params = [{transform_indices = @transform_0, window_bounds = array<i64: 16, 128>}, {pipeline_mode = #tpu.pipeline_mode<synchronous>, transform_indices = @transform_1, window_bounds = array<i64: 4, 16, 16>}, {pipeline_mode = #tpu.pipeline_mode<synchronous>, transform_indices = @transform_2, window_bounds = array<i64: 4, 16, 1>}, {transform_indices = @transform_3, window_bounds = array<i64: 4, 128>}]} {
    %c0 = arith.constant 0 : index
    %c0_0 = arith.constant 0 : index
    %0 = vector.load %arg1[%c0, %c0_0] : memref<16x128xf32, #tpu.memory_space<vmem>>, vector<16x128xf32>
    %1 = arith.truncf %0 : vector<16x128xf32> to vector<16x128xbf16>
    %c0_1 = arith.constant 0 : index
    %c0_2 = arith.constant 0 : index
    %c0_3 = arith.constant 0 : index
    %2 = vector.load %arg2[%c0_1, %c0_2, %c0_3] : memref<4x16x16xbf16, #tpu.memory_space<vmem>>, vector<1x16x16xbf16>
    %3 = vector.shape_cast %2 : vector<1x16x16xbf16> to vector<16x16xbf16>
    %cst = arith.constant dense<0.000000e+00> : vector<16x128xf32>
    %4 = tpu.matmul %3, %1, %cst {dimension_numbers = #tpu.dot_dimension_numbers<[1], [0], [0], [1], [0, 0, 1, 1], [], []>} : vector<16x16xbf16>, vector<16x128xbf16>, vector<16x128xf32> -> vector<16x128xf32>
    %c0_4 = arith.constant 0 : index
    %c0_5 = arith.constant 0 : index
    %c0_6 = arith.constant 0 : index
    %5 = vector.load %arg3[%c0_4, %c0_5, %c0_6] : memref<4x16x1xf32, #tpu.memory_space<vmem>>, vector<1x16x1xf32>
    %6 = vector.shape_cast %5 : vector<1x16x1xf32> to vector<16x1xf32>
    %7 = vector.broadcast %6 : vector<16x1xf32> to vector<16x128xf32>
    %8 = arith.addf %4, %7 : vector<16x128xf32>
    %cst_7 = arith.constant 0.000000e+00 : f32
    %9 = vector.broadcast %cst_7 : f32 to vector<16x128xf32>
    %10 = arith.maximumf %8, %9 : vector<16x128xf32>
    %11 = arith.truncf %10 : vector<16x128xf32> to vector<16x128xbf16>
    %c1 = arith.constant 1 : index
    %c0_8 = arith.constant 0 : index
    %c0_9 = arith.constant 0 : index
    %12 = vector.load %arg2[%c1, %c0_8, %c0_9] : memref<4x16x16xbf16, #tpu.memory_space<vmem>>, vector<1x16x16xbf16>
    %13 = vector.shape_cast %12 : vector<1x16x16xbf16> to vector<16x16xbf16>
    %cst_10 = arith.constant dense<0.000000e+00> : vector<16x128xf32>
    %14 = tpu.matmul %13, %11, %cst_10 {dimension_numbers = #tpu.dot_dimension_numbers<[1], [0], [0], [1], [0, 0, 1, 1], [], []>} : vector<16x16xbf16>, vector<16x128xbf16>, vector<16x128xf32> -> vector<16x128xf32>
    %c1_11 = arith.constant 1 : index
    %c0_12 = arith.constant 0 : index
    %c0_13 = arith.constant 0 : index
    %15 = vector.load %arg3[%c1_11, %c0_12, %c0_13] : memref<4x16x1xf32, #tpu.memory_space<vmem>>, vector<1x16x1xf32>
    %16 = vector.shape_cast %15 : vector<1x16x1xf32> to vector<16x1xf32>
    %17 = vector.broadcast %16 : vector<16x1xf32> to vector<16x128xf32>
    %18 = arith.addf %14, %17 : vector<16x128xf32>
    %cst_14 = arith.constant 0.000000e+00 : f32
    %19 = vector.broadcast %cst_14 : f32 to vector<16x128xf32>
    %20 = arith.maximumf %18, %19 : vector<16x128xf32>
    %21 = arith.truncf %20 : vector<16x128xf32> to vector<16x128xbf16>
    %c2 = arith.constant 2 : index
    %c0_15 = arith.constant 0 : index
    %c0_16 = arith.constant 0 : index
    %22 = vector.load %arg2[%c2, %c0_15, %c0_16] : memref<4x16x16xbf16, #tpu.memory_space<vmem>>, vector<1x16x16xbf16>
    %23 = vector.shape_cast %22 : vector<1x16x16xbf16> to vector<16x16xbf16>
    %cst_17 = arith.constant dense<0.000000e+00> : vector<16x128xf32>
    %24 = tpu.matmul %23, %21, %cst_17 {dimension_numbers = #tpu.dot_dimension_numbers<[1], [0], [0], [1], [0, 0, 1, 1], [], []>} : vector<16x16xbf16>, vector<16x128xbf16>, vector<16x128xf32> -> vector<16x128xf32>
    %c2_18 = arith.constant 2 : index
    %c0_19 = arith.constant 0 : index
    %c0_20 = arith.constant 0 : index
    %25 = vector.load %arg3[%c2_18, %c0_19, %c0_20] : memref<4x16x1xf32, #tpu.memory_space<vmem>>, vector<1x16x1xf32>
    %26 = vector.shape_cast %25 : vector<1x16x1xf32> to vector<16x1xf32>
    %27 = vector.broadcast %26 : vector<16x1xf32> to vector<16x128xf32>
    %28 = arith.addf %24, %27 : vector<16x128xf32>
    %cst_21 = arith.constant 0.000000e+00 : f32
    %29 = vector.broadcast %cst_21 : f32 to vector<16x128xf32>
    %30 = arith.maximumf %28, %29 : vector<16x128xf32>
    %31 = arith.truncf %30 : vector<16x128xf32> to vector<16x128xbf16>
    %c3 = arith.constant 3 : index
    %c0_22 = arith.constant 0 : index
    %c0_23 = arith.constant 0 : index
    %32 = vector.load %arg2[%c3, %c0_22, %c0_23] : memref<4x16x16xbf16, #tpu.memory_space<vmem>>, vector<1x16x16xbf16>
    %33 = vector.shape_cast %32 : vector<1x16x16xbf16> to vector<16x16xbf16>
    %cst_24 = arith.constant dense<0.000000e+00> : vector<16x128xf32>
    %34 = tpu.matmul %33, %31, %cst_24 {dimension_numbers = #tpu.dot_dimension_numbers<[1], [0], [0], [1], [0, 0, 1, 1], [], []>} : vector<16x16xbf16>, vector<16x128xbf16>, vector<16x128xf32> -> vector<16x128xf32>
    %c3_25 = arith.constant 3 : index
    %c0_26 = arith.constant 0 : index
    %c0_27 = arith.constant 0 : index
    %35 = vector.load %arg3[%c3_25, %c0_26, %c0_27] : memref<4x16x1xf32, #tpu.memory_space<vmem>>, vector<1x16x1xf32>
    %36 = vector.shape_cast %35 : vector<1x16x1xf32> to vector<16x1xf32>
    %37 = vector.broadcast %36 : vector<16x1xf32> to vector<16x128xf32>
    %38 = arith.addf %34, %37 : vector<16x128xf32>
    %39 = vector.extract_strided_slice %38 {offsets = [0, 0], sizes = [3, 128], strides = [1, 1]} : vector<16x128xf32> to vector<3x128xf32>
    %cst_28 = arith.constant dense<0xFF800000> : vector<128xf32>
    %40 = vector.multi_reduction <maximumf>, %39, %cst_28 [0] : vector<3x128xf32> to vector<128xf32>
    %41 = vector.shape_cast %40 : vector<128xf32> to vector<1x128xf32>
    %42 = vector.broadcast %41 : vector<1x128xf32> to vector<3x128xf32>
    %43 = arith.subf %39, %42 : vector<3x128xf32>
    %44 = math.exp %43 : vector<3x128xf32>
    %cst_29 = arith.constant dense<0.000000e+00> : vector<128xf32>
    %45 = vector.multi_reduction <add>, %44, %cst_29 [0] : vector<3x128xf32> to vector<128xf32>
    %46 = vector.shape_cast %45 : vector<128xf32> to vector<1x128xf32>
    %47 = tpu.reciprocal %46 {approx = true} : vector<1x128xf32> -> vector<1x128xf32>
    %48 = vector.broadcast %47 : vector<1x128xf32> to vector<3x128xf32>
    %49 = arith.mulf %44, %48 : vector<3x128xf32>
    %50 = vector.extract_strided_slice %38 {offsets = [3, 0], sizes = [1, 128], strides = [1, 1]} : vector<16x128xf32> to vector<1x128xf32>
    %51 = tpu.concatenate %49, %50 in 0 : vector<3x128xf32>, vector<1x128xf32> -> vector<4x128xf32>
    %c0_30 = arith.constant 0 : index
    %c0_31 = arith.constant 0 : index
    %52 = vector.load %arg4[%c0_30, %c0_31] : memref<4x128xf32, #tpu.memory_space<vmem>>, vector<4x128xf32>
    tpu.vector_store %arg4[%c0_30, %c0_31], %51 {strides = array<i32>} : memref<4x128xf32, #tpu.memory_space<vmem>>, vector<4x128xf32>,
    return
  }
  func.func @transform_0(%arg0: i32) -> (i32, i32) {
    %c0_i32 = arith.constant 0 : i32
    %c0_i32_0 = arith.constant 0 : i32
    return %c0_i32, %arg0 : i32, i32
  }
  func.func @transform_1(%arg0: i32) -> (i32, i32, i32) {
    %c0_i32 = arith.constant 0 : i32
    %c0_i32_0 = arith.constant 0 : i32
    %c0_i32_1 = arith.constant 0 : i32
    %c0_i32_2 = arith.constant 0 : i32
    return %c0_i32, %c0_i32_0, %c0_i32_1 : i32, i32, i32
  }
  func.func @transform_2(%arg0: i32) -> (i32, i32, i32) {
    %c0_i32 = arith.constant 0 : i32
    %c0_i32_0 = arith.constant 0 : i32
    %c0_i32_1 = arith.constant 0 : i32
    %c0_i32_2 = arith.constant 0 : i32
    return %c0_i32, %c0_i32_0, %c0_i32_1 : i32, i32, i32
  }
  func.func @transform_3(%arg0: i32) -> (i32, i32) {
    %c0_i32 = arith.constant 0 : i32
    %c0_i32_0 = arith.constant 0 : i32
    return %c0_i32, %arg0 : i32, i32
  }
}

</mosaic_0001>

<llo_original>
// kernel: tpu_custom_call.1
$region0: #{tpu_custom_call.1}
  #allocation0 [shape = 'u32[]', space=smem, size = 0x4, offset = 0x4, fixed_abs, tag = 'smem constant byte address 0x4 - core index']
  #allocation1 [shape = 'u32[72,128]{1,0:T(1,128)}', space=vmem, size = 0x9000, scoped, tag = 'internal scratch']
  %s0 = inlined_call_operand.vmem [shape: f32[16,128], index: 0, kind: input, shape index: {}]
  %s1 = inlined_call_operand.vmem [shape: bf16[4,16,16], index: 1, kind: input, shape index: {}]
  %s2 = inlined_call_operand.vmem [shape: f32[4,16,1], index: 2, kind: input, shape index: {}]
  %s3 = inlined_call_operand.hbm [shape: f32[4,128], index: 3, kind: output, shape index: {}]
  %s4 = sld [smem:[#allocation0]]
  $region22: #{tpu_custom_call.1} parent=0
    _
  %s6 = ssub.s32 1, %s4
  %s7 = scalar_select 0, %s6, %s4
  $region1: #{tpu_custom_call.1} parent=0
    #allocation2 [shape = 'u8[2048]{0}', space=vmem, size = 0x800, scoped, tag = 'output window, operand 0, single buffered']
    #allocation3 [shape = 's32[1]{0}', space=sflag, size = 0x4, scoped, tag = 'scoped memory for tpu_custom_call.1']
    %8 = vsyncpa [#allocation3], 0
    // Predicated region
    $region2: #{tpu_custom_call.1} parent=1 // pred_check
      _
    $region3: #{tpu_custom_call.1} parent=1 // pred_check_branch
      %10 = sbr.rel (0) target = $region5
    $region4: #{tpu_custom_call.1} parent=1 // pred_region
      _
    $region5: #{tpu_custom_call.1} parent=1 // pred_fallthru
      _
    // Predicated region
    $region6: #{tpu_custom_call.1} parent=1 // pred_check
      _
    $region7: #{tpu_custom_call.1} parent=1 // pred_check_branch
      %12 = sbr.rel (0) target = $region9
    $region8: #{tpu_custom_call.1} parent=1 // pred_region
      _
    $region9: #{tpu_custom_call.1} parent=1 // pred_fallthru
      _
    // Predicated region
    $region10: #{tpu_custom_call.1} parent=1 // pred_check
      _
    $region11: #{tpu_custom_call.1} parent=1 // pred_check_branch
      %14 = sbr.rel (0) target = $region13
    $region12: #{tpu_custom_call.1} parent=1 // pred_region
      _
    $region13: #{tpu_custom_call.1} parent=1 // pred_fallthru
      _
    %v16 = vld [vmem:[%s0] sm:$0xff]
    %v17 = vld [vmem:[%s0 + $0x8] sm:$0xff]
    %v18 = vpack.c.bf16 %v17, %v16
    %v19 = vld [vmem:[%s1] sm:$0xf]
    %v20 = vld [vmem:[%s1 + $0x4] sm:$0xf]
    %v21 = vld [vmem:[%s2] sm:$0xff]
    %v22 = vld [vmem:[%s2 + $0x8] sm:$0xff]
    %24 = vset.pattern.permute.xlu0 0
    %25 = vperm.xlu0 %24, %v21
    %v26 = vpop.permute.xlu0 %25
    %29 = vset.pattern.permute.xlu0 0
    %30 = vperm.xlu0 %29, %v22
    %v31 = vpop.permute.xlu0 %30
    %v35 = vunpack.c.l.b16 %v19
    %v36 = vunpack.c.l.b16 %v20
    %v37 = vpack.c.b16 %v36, %v35
    %vm38 = vcmask 130048
    %v40 = vsel %vm38, %v37, 0
    %42 = vmatpush.bf16.msra.mxu0 0
    %43 = vmatpush.bf16.msra.mxu0 0
    %44 = vmatpush.bf16.msra.mxu0 0
    %45 = vmatpush.bf16.msra.mxu0 0
    %46 = vmatpush.bf16.msra.mxu0 0
    %47 = vmatpush.bf16.msra.mxu0 0
    %48 = vmatpush.bf16.msra.mxu0 0
    %49 = vmatpush.bf16.msra.mxu0 %v18
    %50 = vmatmul.bf16.gmra.mxu0 %v40
    %v51 = vpop.f32.mrf.mxu0
    %v52 = vadd.f32 %v26, %v51
    %v53 = vpop.f32.mrf.mxu0
    %v54 = vadd.f32 %v31, %v53
    %55 = vdwg.mxu0
    %v56 = vmax.f32 %v52, 0.0
    %v57 = vmax.f32 %v54, 0.0
    %v58 = vpack.c.bf16 %v57, %v56
    %s59 = scalar_lea.vmem %s1, 8
    %v60 = vld [vmem:[%s59] sm:$0xf]
    %v61 = vld [vmem:[%s59 + $0x4] sm:$0xf]
    %s62 = scalar_lea.vmem %s2, 16
    %v63 = vld [vmem:[%s62] sm:$0xff]
    %v64 = vld [vmem:[%s62 + $0x8] sm:$0xff]
    %66 = vset.pattern.permute.xlu0 0
    %67 = vperm.xlu0 %66, %v63
    %v68 = vpop.permute.xlu0 %67
    %71 = vset.pattern.permute.xlu0 0
    %72 = vperm.xlu0 %71, %v64
    %v73 = vpop.permute.xlu0 %72
    %v77 = vunpack.c.l.b16 %v60
    %v78 = vunpack.c.l.b16 %v61
    %v79 = vpack.c.b16 %v78, %v77
    %v81 = vsel %vm38, %v79, 0
    %83 = vmatpush.bf16.msra.mxu0 0
    %84 = vmatpush.bf16.msra.mxu0 0
    %85 = vmatpush.bf16.msra.mxu0 0
    %86 = vmatpush.bf16.msra.mxu0 0
    %87 = vmatpush.bf16.msra.mxu0 0
    %88 = vmatpush.bf16.msra.mxu0 0
    %89 = vmatpush.bf16.msra.mxu0 0
    %90 = vmatpush.bf16.msra.mxu0 %v58
    %91 = vmatmul.bf16.gmra.mxu0 %v81
    %v92 = vpop.f32.mrf.mxu0
    %v93 = vadd.f32 %v68, %v92
    %v94 = vpop.f32.mrf.mxu0
    %v95 = vadd.f32 %v73, %v94
    %96 = vdwg.mxu0
    %v97 = vmax.f32 %v93, 0.0
    %v98 = vmax.f32 %v95, 0.0
    %v99 = vpack.c.bf16 %v98, %v97
    %s100 = scalar_lea.vmem %s1, 16
    %v101 = vld [vmem:[%s100] sm:$0xf]
    %v102 = vld [vmem:[%s100 + $0x4] sm:$0xf]
    %s103 = scalar_lea.vmem %s2, 32
    %v104 = vld [vmem:[%s103] sm:$0xff]
    %v105 = vld [vmem:[%s103 + $0x8] sm:$0xff]
    %107 = vset.pattern.permute.xlu0 0
    %108 = vperm.xlu0 %107, %v104
    %v109 = vpop.permute.xlu0 %108
    %112 = vset.pattern.permute.xlu0 0
    %113 = vperm.xlu0 %112, %v105
    %v114 = vpop.permute.xlu0 %113
    %v118 = vunpack.c.l.b16 %v101
    %v119 = vunpack.c.l.b16 %v102
    %v120 = vpack.c.b16 %v119, %v118
    %v122 = vsel %vm38, %v120, 0
    %124 = vmatpush.bf16.msra.mxu0 0
    %125 = vmatpush.bf16.msra.mxu0 0
    %126 = vmatpush.bf16.msra.mxu0 0
    %127 = vmatpush.bf16.msra.mxu0 0
    %128 = vmatpush.bf16.msra.mxu0 0
    %129 = vmatpush.bf16.msra.mxu0 0
    %130 = vmatpush.bf16.msra.mxu0 0
    %131 = vmatpush.bf16.msra.mxu0 %v99
    %132 = vmatmul.bf16.gmra.mxu0 %v122
    %v133 = vpop.f32.mrf.mxu0
    %v134 = vadd.f32 %v109, %v133
    %v135 = vpop.f32.mrf.mxu0
    %v136 = vadd.f32 %v114, %v135
    %137 = vdwg.mxu0
    %v138 = vmax.f32 %v134, 0.0
    %v139 = vmax.f32 %v136, 0.0
    %v140 = vpack.c.bf16 %v139, %v138
    %s141 = scalar_lea.vmem %s1, 24
    %v142 = vld [vmem:[%s141] sm:$0xf]
    %v143 = vld [vmem:[%s141 + $0x4] sm:$0xf]
    %s144 = scalar_lea.vmem %s2, 48
    %v145 = vld [vmem:[%s144] sm:$0xff]
    %v146 = vld [vmem:[%s144 + $0x8] sm:$0xff]
    %148 = vset.pattern.permute.xlu0 0
    %149 = vperm.xlu0 %148, %v145
    %v150 = vpop.permute.xlu0 %149
    %153 = vset.pattern.permute.xlu0 0
    %154 = vperm.xlu0 %153, %v146
    %v155 = vpop.permute.xlu0 %154
    %v158 = vunpack.c.l.b16 %v142
    %v159 = vunpack.c.l.b16 %v143
    %v160 = vpack.c.b16 %v159, %v158
    %v162 = vsel %vm38, %v160, 0
    %164 = vmatpush.bf16.msra.mxu0 0
    %165 = vmatpush.bf16.msra.mxu0 0
    %166 = vmatpush.bf16.msra.mxu0 0
    %167 = vmatpush.bf16.msra.mxu0 0
    %168 = vmatpush.bf16.msra.mxu0 0
    %169 = vmatpush.bf16.msra.mxu0 0
    %170 = vmatpush.bf16.msra.mxu0 0
    %171 = vmatpush.bf16.msra.mxu0 %v140
    %172 = vmatmul.bf16.gmra.mxu0 %v162
    %v173 = vpop.f32.mrf.mxu0
    %v174 = vadd.f32 %v150, %v173
    %v175 = vpop.f32.mrf.mxu0
    %176 = vdwg.mxu0
    %vm177 = vcmask 1042432
    %v178 = vsel %vm177, %v174, -inf
    %v179 = vrot.slane %v178, 4
    %v180 = vmax.f32 %v178, %v179
    %v181 = vrot.slane %v180, 2
    %v182 = vmax.f32 %v180, %v181
    %v183 = vrot.slane %v182, 1
    %v184 = vmax.f32 %v182, %v183
    %v185 = vsub.f32 %v174, %v184
    %v186 = vmul.f32 %v185, 1.442695
    %v187 = vpow.pop %v186
    %v188 = vsel %vm177, %v187, 0.0
    %v189 = vrot.slane %v188, 4
    %v190 = vadd.f32 %v188, %v189
    %v191 = vrot.slane %v190, 2
    %v192 = vadd.f32 %v190, %v191
    %v193 = vrot.slane %v192, 1
    %v194 = vadd.f32 %v192, %v193
    %v195 = vrcp.pop %v194
    %v196 = vmul.f32 %v187, %v195
    %v197 = vsel %vm177, %v196, %v174
    %198 = vst [vmem:[#allocation2] sm:$0xf] %v197
    // Predicated region
    $region14: #{tpu_custom_call.1} parent=1 // pred_check
      _
    $region15: #{tpu_custom_call.1} parent=1 // pred_check_branch
      %200 = sbr.rel (0) target = $region17
    $region16: #{tpu_custom_call.1} parent=1 // pred_region
      %202 = vsyncadd [#allocation3], 0
      %s204 = sshll.u32 [#allocation2], 4
      %s205 = int_to_ptr.vmem [resolvable:$true] %s204
      %s206 = sshll.u32 %s3, 4
      %s207 = int_to_ptr.hbm [resolvable:$true] %s206
      %209 = dma.vmem_to_hbm [thread:$0]  %s205, 64, %s207, [#allocation3]
    $region17: #{tpu_custom_call.1} parent=1 // pred_fallthru
      _
    // Predicated region
    $region18: #{tpu_custom_call.1} parent=1 // pred_check
      _
    $region19: #{tpu_custom_call.1} parent=1 // pred_check_branch
      %211 = sbr.rel (0) target = $region21
    $region20: #{tpu_custom_call.1} parent=1 // pred_region
      %213 = dma.done [#allocation3], 64
    $region21: #{tpu_custom_call.1} parent=1 // pred_fallthru
      _
    %214 = vsyncpa [#allocation3], 1

</llo_original>
